<compile_context>
chip_gen: v5e
topology: v5e:2x2
jax: 0.10.0
libtpu: 0.0.40
codegen_flags: <defaults>
</compile_context>

<pallas_src>
import functools

import jax
import jax.numpy as jnp
from jax.experimental import pallas as pl
from jax.experimental.pallas import tpu as pltpu


def _round_up(v, m):
    return ((v + m - 1) // m) * m


def _cdiv(a, b):
    return -(-a // b)


def _pad_feature(n):
    # 256-aligned for large dims (fills the 256-wide MXU on v6e/v7x); 128 for
    # genuinely small dims (v5e's 128x128 MXUs are matched either way).
    return _round_up(n, 256) if n > 128 else _round_up(n, 128)


def mlp1_kernel(x_ref, w1_ref, b1_ref, w2_ref, b2_ref, o_ref):
    """One batch tile of fused fc1 -> ReLU -> fc2.

    x_ref : (tile_b, n_in)  f32   (cast to bf16 here, on the VPU)
    w1_ref: (n_in,  d_hid)  bf16  (VMEM-resident, constant across the grid)
    b1_ref: (1,     d_hid)  f32
    w2_ref: (d_hid, d_out)  bf16
    b2_ref: (1,     d_out)  f32
    o_ref : (tile_b, d_out) out dtype
    """
    x = x_ref[...].astype(jnp.bfloat16)
    h = b1_ref[...] + jnp.dot(x, w1_ref[...], preferred_element_type=jnp.float32)
    h = jnp.maximum(h, 0.0).astype(jnp.bfloat16)
    out = b2_ref[...] + jnp.dot(h, w2_ref[...], preferred_element_type=jnp.float32)
    o_ref[...] = out.astype(o_ref.dtype)


def prepare_params(params):
    """One-time padding/cast of the weights. Call once, NOT per forward.

    Only the hidden/output feature dims are padded (to lane-dense multiples);
    the padded rows/cols are zero so the math stays exact. The input feature
    dim is left unpadded (the kernel takes x at its true width).
    """
    w1, b1, w2, b2 = params
    n_in, n_hid = w1.shape
    n_out = w2.shape[1]
    d_hid = _pad_feature(n_hid)
    d_out = _pad_feature(n_out)
    w1_p = jnp.zeros((n_in, d_hid), jnp.bfloat16).at[:, :n_hid].set(
        w1.astype(jnp.bfloat16))
    b1_p = jnp.zeros((1, d_hid), jnp.float32).at[:, :n_hid].set(b1)
    w2_p = jnp.zeros((d_hid, d_out), jnp.bfloat16).at[:n_hid, :n_out].set(
        w2.astype(jnp.bfloat16))
    b2_p = jnp.zeros((1, d_out), jnp.float32).at[:, :n_out].set(b2)
    return (w1_p, b1_p, w2_p, b2_p)


def _choose_tile_b(B, tile_b):
    tile = min(tile_b, _round_up(B, 8))
    # Give the v7x megacore >=2 grid steps when the batch is big enough.
    if _cdiv(B, tile) < 2 and B > 8:
        tile = max(8, _round_up(_cdiv(B, 2), 8))
    return tile


@functools.partial(
    jax.jit,
    static_argnames=("tile_b", "out_dtype", "single_buffer_weights"),
)
def mlp1_forward_padded(x, w1_p, b1_p, w2_p, b2_p, *, tile_b=512,
                        out_dtype=jnp.float32, single_buffer_weights=True):
    """Fused fc1 -> ReLU -> fc2 on prepared (padded, bf16) params.

    Returns the lane-padded output (B, d_out); the caller slices [:, :n_out]
    lazily (a no-op when n_out is already a multiple of 128).
    """
    B, n_in = x.shape
    d_hid = w1_p.shape[1]
    d_out = w2_p.shape[1]

    tile = _choose_tile_b(B, tile_b)
    grid = (_cdiv(B, tile),)

    # Resident weights single-buffered (their block never changes); x/out
    # tiles stay double-buffered for the pipelined HBM stream.
    buffered_once = None
    if single_buffer_weights and hasattr(pl, "Buffered"):
        buffered_once = pl.Buffered(1)

    def const_spec(shape):
        if buffered_once is not None:
            return pl.BlockSpec(shape, lambda i: (0, 0),
                                pipeline_mode=buffered_once)
        return pl.BlockSpec(shape, lambda i: (0, 0))

    out_itemsize = jnp.dtype(out_dtype).itemsize
    param_bytes = (n_in * d_hid + d_hid * d_out) * 2 + (d_hid + d_out) * 4
    resident_bytes = param_bytes * (1 if buffered_once is not None else 2)
    stream_bytes = (2 * tile * n_in * x.dtype.itemsize
                    + 2 * tile * d_out * out_itemsize)
    scratch_bytes = tile * d_hid * 6  # f32 h + bf16 copy of h
    vmem_limit = int(min(
        64 * 2 ** 20,
        max(32 * 2 ** 20, 2 * (resident_bytes + stream_bytes + scratch_bytes)),
    ))
    # TODO(synk): if the resident weights ever exceed ~20-24 MiB (v7x has only
    # 64 MiB VMEM per TensorCore), add a K-tiling grid axis over d_hid with an
    # f32 accumulator scratch + pl.when init/finalize instead of residency.

    cost = pl.CostEstimate(
        flops=2 * B * (n_in * d_hid + d_hid * d_out),
        transcendentals=0,
        bytes_accessed=(B * n_in * x.dtype.itemsize + param_bytes
                        + B * d_out * out_itemsize),
    )

    return pl.pallas_call(
        mlp1_kernel,
        out_shape=jax.ShapeDtypeStruct((B, d_out), out_dtype),
        grid=grid,
        in_specs=[
            # x: one batch tile per grid step (auto double-buffered DMA);
            # last dim == full array dim, so no 128-padding of x is needed.
            pl.BlockSpec((tile, n_in), lambda i: (i, 0)),
            const_spec((n_in, d_hid)),
            const_spec((1, d_hid)),
            const_spec((d_hid, d_out)),
            const_spec((1, d_out)),
        ],
        out_specs=pl.BlockSpec((tile, d_out), lambda i: (i, 0)),
        compiler_params=pltpu.CompilerParams(
            dimension_semantics=("parallel",),
            vmem_limit_bytes=vmem_limit,
        ),
        cost_estimate=cost,
    )(x, w1_p, b1_p, w2_p, b2_p)


def mlp1_apply(x, prepared_params, n_out, **kwargs):
    """Module-equivalent forward: returns (B, n_out)."""
    out = mlp1_forward_padded(x, *prepared_params, **kwargs)
    return out if out.shape[1] == n_out else out[:, :n_out]


def init_params(key, n_input, n_hidden, n_output):
    """Deterministic init mimicking nn.Linear default U(-1/sqrt(fan_in), ...)."""
    ks = jax.random.split(key, 4)

    def linear(kw, kb, fan_in, fan_out):
        bound = 1.0 / jnp.sqrt(jnp.float32(fan_in))
        w = jax.random.uniform(kw, (fan_in, fan_out), jnp.float32, -bound, bound)
        b = jax.random.uniform(kb, (1, fan_out), jnp.float32, -bound, bound)
        return w, b

    w1, b1 = linear(ks[0], ks[1], n_input, n_hidden)
    w2, b2 = linear(ks[2], ks[3], n_hidden, n_output)
    return (w1, b1, w2, b2)


def mlp1_reference(x, params):
    """Pure-JAX reference in full f32 precision."""
    w1, b1, w2, b2 = params
    h = jnp.maximum(x @ w1 + b1, 0.0)
    return h @ w2 + b2


def mlp1_reference_bf16(x, params):
    """Reference matching the kernel's precision (bf16 operands, f32 accum)."""
    w1, b1, w2, b2 = params
    h = b1 + jnp.dot(
        x.astype(jnp.bfloat16), w1.astype(jnp.bfloat16),
        preferred_element_type=jnp.float32,
    )
    h = jnp.maximum(h, 0.0)
    return b2 + jnp.dot(
        h.astype(jnp.bfloat16), w2.astype(jnp.bfloat16),
        preferred_element_type=jnp.float32,
    )


if __name__ == "__main__":
    key = jax.random.PRNGKey(0)
    k_x, k_p = jax.random.split(key)

    # Small shapes consistent with MLP1Layer.forward: x is (batch, n_input).
    B, n_input, n_hidden, n_output = 8, 32, 64, 4

    x = jax.random.normal(k_x, (B, n_input), jnp.float32)
    params = init_params(k_p, n_input, n_hidden, n_output)
    prepared = prepare_params(params)  # one-time weight pad/cast, NOT per call

    try:
        out_padded = mlp1_forward_padded(x, *prepared)
    except Exception:
        # Installed jax rejected pipeline_mode on the constant weight specs;
        # fall back to default double-buffering (identical results).
        out_padded = mlp1_forward_padded(x, *prepared,
                                         single_buffer_weights=False)
    out_padded = jax.block_until_ready(out_padded)

    # Lazy consumer-side slice (would be a no-op if n_output % 128 == 0).
    out = out_padded[:B, :n_output]
    assert out.shape == (B, n_output)

    # Check against a precision-matched (bf16-operand, f32-accum) reference.
    ref_bf16 = mlp1_reference_bf16(x, params)
    assert jnp.allclose(out, ref_bf16, atol=2e-3, rtol=2e-3), (
        jnp.max(jnp.abs(out - ref_bf16))
    )
    # Loose check against the full-f32 reference (bf16 rounding only).
    ref_f32 = mlp1_reference(x, params)
    assert jnp.allclose(out, ref_f32, atol=3e-2, rtol=3e-2), (
        jnp.max(jnp.abs(out - ref_f32))
    )

    print("KERNEL_OK")
</pallas_src>

<mosaic_0001>
module attributes {stable_mosaic.version = 11 : i64} {
  func.func @mlp1_kernel(%arg0: i32, %arg1: memref<8x32xf32, #tpu.memory_space<vmem>>, %arg2: memref<32x128xbf16, #tpu.memory_space<vmem>>, %arg3: memref<1x128xf32, #tpu.memory_space<vmem>>, %arg4: memref<128x128xbf16, #tpu.memory_space<vmem>>, %arg5: memref<1x128xf32, #tpu.memory_space<vmem>>, %arg6: memref<8x128xf32, #tpu.memory_space<vmem>>) attributes {dimension_semantics = [#tpu.dimension_semantics<parallel>], iteration_bounds = array<i64: 1>, scalar_prefetch = 0 : i64, scratch_operands = 0 : i64, tpu.core_type = #tpu.core_type<tc>, window_params = [{transform_indices = @transform_0, window_bounds = array<i64: 8, 32>}, {pipeline_mode = #tpu.pipeline_mode<synchronous>, transform_indices = @transform_1, window_bounds = array<i64: 32, 128>}, {pipeline_mode = #tpu.pipeline_mode<synchronous>, transform_indices = @transform_2, window_bounds = array<i64: 1, 128>}, {pipeline_mode = #tpu.pipeline_mode<synchronous>, transform_indices = @transform_3, window_bounds = array<i64: 128, 128>}, {pipeline_mode = #tpu.pipeline_mode<synchronous>, transform_indices = @transform_4, window_bounds = array<i64: 1, 128>}, {transform_indices = @transform_5, window_bounds = array<i64: 8, 128>}]} {
    %c0 = arith.constant 0 : index
    %c0_0 = arith.constant 0 : index
    %0 = vector.load %arg1[%c0, %c0_0] : memref<8x32xf32, #tpu.memory_space<vmem>>, vector<8x32xf32>
    %1 = arith.truncf %0 : vector<8x32xf32> to vector<8x32xbf16>
    %c0_1 = arith.constant 0 : index
    %c0_2 = arith.constant 0 : index
    %2 = vector.load %arg3[%c0_1, %c0_2] : memref<1x128xf32, #tpu.memory_space<vmem>>, vector<1x128xf32>
    %c0_3 = arith.constant 0 : index
    %c0_4 = arith.constant 0 : index
    %3 = vector.load %arg2[%c0_3, %c0_4] : memref<32x128xbf16, #tpu.memory_space<vmem>>, vector<32x128xbf16>
    %cst = arith.constant dense<0.000000e+00> : vector<8x128xf32>
    %4 = tpu.matmul %1, %3, %cst {dimension_numbers = #tpu.dot_dimension_numbers<[1], [0], [0], [1], [0, 0, 1, 1], [], []>} : vector<8x32xbf16>, vector<32x128xbf16>, vector<8x128xf32> -> vector<8x128xf32>
    %5 = vector.broadcast %2 : vector<1x128xf32> to vector<8x128xf32>
    %6 = arith.addf %5, %4 : vector<8x128xf32>
    %cst_5 = arith.constant 0.000000e+00 : f32
    %7 = vector.broadcast %cst_5 : f32 to vector<8x128xf32>
    %8 = arith.maximumf %6, %7 : vector<8x128xf32>
    %9 = arith.truncf %8 : vector<8x128xf32> to vector<8x128xbf16>
    %c0_6 = arith.constant 0 : index
    %c0_7 = arith.constant 0 : index
    %10 = vector.load %arg5[%c0_6, %c0_7] : memref<1x128xf32, #tpu.memory_space<vmem>>, vector<1x128xf32>
    %c0_8 = arith.constant 0 : index
    %c0_9 = arith.constant 0 : index
    %11 = vector.load %arg4[%c0_8, %c0_9] : memref<128x128xbf16, #tpu.memory_space<vmem>>, vector<128x128xbf16>
    %cst_10 = arith.constant dense<0.000000e+00> : vector<8x128xf32>
    %12 = tpu.matmul %9, %11, %cst_10 {dimension_numbers = #tpu.dot_dimension_numbers<[1], [0], [0], [1], [0, 0, 1, 1], [], []>} : vector<8x128xbf16>, vector<128x128xbf16>, vector<8x128xf32> -> vector<8x128xf32>
    %13 = vector.broadcast %10 : vector<1x128xf32> to vector<8x128xf32>
    %14 = arith.addf %13, %12 : vector<8x128xf32>
    %c0_11 = arith.constant 0 : index
    %c0_12 = arith.constant 0 : index
    %15 = vector.load %arg6[%c0_11, %c0_12] : memref<8x128xf32, #tpu.memory_space<vmem>>, vector<8x128xf32>
    tpu.vector_store %arg6[%c0_11, %c0_12], %14 {strides = array<i32>} : memref<8x128xf32, #tpu.memory_space<vmem>>, vector<8x128xf32>,
    return
  }
  func.func @transform_0(%arg0: i32) -> (i32, i32) {
    %c0_i32 = arith.constant 0 : i32
    %c0_i32_0 = arith.constant 0 : i32
    return %arg0, %c0_i32 : i32, i32
  }
  func.func @transform_1(%arg0: i32) -> (i32, i32) {
    %c0_i32 = arith.constant 0 : i32
    %c0_i32_0 = arith.constant 0 : i32
    %c0_i32_1 = arith.constant 0 : i32
    return %c0_i32, %c0_i32_0 : i32, i32
  }
  func.func @transform_2(%arg0: i32) -> (i32, i32) {
    %c0_i32 = arith.constant 0 : i32
    %c0_i32_0 = arith.constant 0 : i32
    %c0_i32_1 = arith.constant 0 : i32
    return %c0_i32, %c0_i32_0 : i32, i32
  }
  func.func @transform_3(%arg0: i32) -> (i32, i32) {
    %c0_i32 = arith.constant 0 : i32
    %c0_i32_0 = arith.constant 0 : i32
    %c0_i32_1 = arith.constant 0 : i32
    return %c0_i32, %c0_i32_0 : i32, i32
  }
  func.func @transform_4(%arg0: i32) -> (i32, i32) {
    %c0_i32 = arith.constant 0 : i32
    %c0_i32_0 = arith.constant 0 : i32
    %c0_i32_1 = arith.constant 0 : i32
    return %c0_i32, %c0_i32_0 : i32, i32
  }
  func.func @transform_5(%arg0: i32) -> (i32, i32) {
    %c0_i32 = arith.constant 0 : i32
    %c0_i32_0 = arith.constant 0 : i32
    return %arg0, %c0_i32 : i32, i32
  }
}

module attributes {stable_mosaic.version = 11 : i64} {
  func.func @mlp1_kernel(%arg0: i32, %arg1: memref<8x32xf32, #tpu.memory_space<vmem>>, %arg2: memref<32x128xbf16, #tpu.memory_space<vmem>>, %arg3: memref<1x128xf32, #tpu.memory_space<vmem>>, %arg4: memref<128x128xbf16, #tpu.memory_space<vmem>>, %arg5: memref<1x128xf32, #tpu.memory_space<vmem>>, %arg6: memref<8x128xf32, #tpu.memory_space<vmem>>) attributes {dimension_semantics = [#tpu.dimension_semantics<parallel>], iteration_bounds = array<i64: 1>, scalar_prefetch = 0 : i64, scratch_operands = 0 : i64, tpu.core_type = #tpu.core_type<tc>, window_params = [{transform_indices = @transform_0, window_bounds = array<i64: 8, 32>}, {pipeline_mode = #tpu.pipeline_mode<synchronous>, transform_indices = @transform_1, window_bounds = array<i64: 32, 128>}, {pipeline_mode = #tpu.pipeline_mode<synchronous>, transform_indices = @transform_2, window_bounds = array<i64: 1, 128>}, {pipeline_mode = #tpu.pipeline_mode<synchronous>, transform_indices = @transform_3, window_bounds = array<i64: 128, 128>}, {pipeline_mode = #tpu.pipeline_mode<synchronous>, transform_indices = @transform_4, window_bounds = array<i64: 1, 128>}, {transform_indices = @transform_5, window_bounds = array<i64: 8, 128>}]} {
    %c0 = arith.constant 0 : index
    %c0_0 = arith.constant 0 : index
    %0 = vector.load %arg1[%c0, %c0_0] : memref<8x32xf32, #tpu.memory_space<vmem>>, vector<8x32xf32>
    %1 = arith.truncf %0 : vector<8x32xf32> to vector<8x32xbf16>
    %c0_1 = arith.constant 0 : index
    %c0_2 = arith.constant 0 : index
    %2 = vector.load %arg3[%c0_1, %c0_2] : memref<1x128xf32, #tpu.memory_space<vmem>>, vector<1x128xf32>
    %c0_3 = arith.constant 0 : index
    %c0_4 = arith.constant 0 : index
    %3 = vector.load %arg2[%c0_3, %c0_4] : memref<32x128xbf16, #tpu.memory_space<vmem>>, vector<32x128xbf16>
    %cst = arith.constant dense<0.000000e+00> : vector<8x128xf32>
    %4 = tpu.matmul %1, %3, %cst {dimension_numbers = #tpu.dot_dimension_numbers<[1], [0], [0], [1], [0, 0, 1, 1], [], []>} : vector<8x32xbf16>, vector<32x128xbf16>, vector<8x128xf32> -> vector<8x128xf32>
    %5 = vector.broadcast %2 : vector<1x128xf32> to vector<8x128xf32>
    %6 = arith.addf %5, %4 : vector<8x128xf32>
    %cst_5 = arith.constant 0.000000e+00 : f32
    %7 = vector.broadcast %cst_5 : f32 to vector<8x128xf32>
    %8 = arith.maximumf %6, %7 : vector<8x128xf32>
    %9 = arith.truncf %8 : vector<8x128xf32> to vector<8x128xbf16>
    %c0_6 = arith.constant 0 : index
    %c0_7 = arith.constant 0 : index
    %10 = vector.load %arg5[%c0_6, %c0_7] : memref<1x128xf32, #tpu.memory_space<vmem>>, vector<1x128xf32>
    %c0_8 = arith.constant 0 : index
    %c0_9 = arith.constant 0 : index
    %11 = vector.load %arg4[%c0_8, %c0_9] : memref<128x128xbf16, #tpu.memory_space<vmem>>, vector<128x128xbf16>
    %cst_10 = arith.constant dense<0.000000e+00> : vector<8x128xf32>
    %12 = tpu.matmul %9, %11, %cst_10 {dimension_numbers = #tpu.dot_dimension_numbers<[1], [0], [0], [1], [0, 0, 1, 1], [], []>} : vector<8x128xbf16>, vector<128x128xbf16>, vector<8x128xf32> -> vector<8x128xf32>
    %13 = vector.broadcast %10 : vector<1x128xf32> to vector<8x128xf32>
    %14 = arith.addf %13, %12 : vector<8x128xf32>
    %c0_11 = arith.constant 0 : index
    %c0_12 = arith.constant 0 : index
    %15 = vector.load %arg6[%c0_11, %c0_12] : memref<8x128xf32, #tpu.memory_space<vmem>>, vector<8x128xf32>
    tpu.vector_store %arg6[%c0_11, %c0_12], %14 {strides = array<i32>} : memref<8x128xf32, #tpu.memory_space<vmem>>, vector<8x128xf32>,
    return
  }
  func.func @transform_0(%arg0: i32) -> (i32, i32) {
    %c0_i32 = arith.constant 0 : i32
    %c0_i32_0 = arith.constant 0 : i32
    return %arg0, %c0_i32 : i32, i32
  }
  func.func @transform_1(%arg0: i32) -> (i32, i32) {
    %c0_i32 = arith.constant 0 : i32
    %c0_i32_0 = arith.constant 0 : i32
    %c0_i32_1 = arith.constant 0 : i32
    return %c0_i32, %c0_i32_0 : i32, i32
  }
  func.func @transform_2(%arg0: i32) -> (i32, i32) {
    %c0_i32 = arith.constant 0 : i32
    %c0_i32_0 = arith.constant 0 : i32
    %c0_i32_1 = arith.constant 0 : i32
    return %c0_i32, %c0_i32_0 : i32, i32
  }
  func.func @transform_3(%arg0: i32) -> (i32, i32) {
    %c0_i32 = arith.constant 0 : i32
    %c0_i32_0 = arith.constant 0 : i32
    %c0_i32_1 = arith.constant 0 : i32
    return %c0_i32, %c0_i32_0 : i32, i32
  }
  func.func @transform_4(%arg0: i32) -> (i32, i32) {
    %c0_i32 = arith.constant 0 : i32
    %c0_i32_0 = arith.constant 0 : i32
    %c0_i32_1 = arith.constant 0 : i32
    return %c0_i32, %c0_i32_0 : i32, i32
  }
  func.func @transform_5(%arg0: i32) -> (i32, i32) {
    %c0_i32 = arith.constant 0 : i32
    %c0_i32_0 = arith.constant 0 : i32
    return %arg0, %c0_i32 : i32, i32
  }
}

</mosaic_0001>

<llo_original>
// kernel: mlp1_forward_padded.1
$region0: #{mlp1_forward_padded.1}
  #allocation0 [shape = 'u32[]', space=smem, size = 0x4, offset = 0x4, fixed_abs, tag = 'smem constant byte address 0x4 - core index']
  #allocation1 [shape = 'u32[72,128]{1,0:T(1,128)}', space=vmem, size = 0x9000, scoped, tag = 'internal scratch']
  %s0 = inlined_call_operand.hbm [shape: f32[8,32], index: 0, kind: input, shape index: {}]
  %s1 = inlined_call_operand.hbm [shape: bf16[32,128], index: 1, kind: input, shape index: {}]
  %s2 = inlined_call_operand.vmem [shape: f32[1,128], index: 2, kind: input, shape index: {}]
  %s3 = inlined_call_operand.hbm [shape: bf16[128,128], index: 3, kind: input, shape index: {}]
  %s4 = inlined_call_operand.vmem [shape: f32[1,128], index: 4, kind: input, shape index: {}]
  %s5 = inlined_call_operand.hbm [shape: f32[8,128], index: 5, kind: output, shape index: {}]
  %s6 = sld [smem:[#allocation0]]
  $region42: #{mlp1_forward_padded.1} parent=0
    _
  %s8 = ssub.s32 1, %s6
  %s9 = scalar_select 0, %s8, %s6
  $region1: #{mlp1_forward_padded.1} parent=0
    #allocation2 [shape = 'u8[4096]{0}', space=vmem, size = 0x1000, scoped, tag = 'input window, operand 0, single buffered']
    #allocation3 [shape = 's32[1]{0}', space=sflag, size = 0x4, scoped, tag = 'scoped memory for mlp1_forward_padded.1']
    #allocation4 [shape = 's32[1]{0}', space=sflag, size = 0x4, scoped, tag = 'scoped memory for mlp1_forward_padded.1']
    #allocation5 [shape = 'u8[8192]{0}', space=vmem, size = 0x2000, scoped, tag = 'input window, operand 1, single buffered']
    #allocation6 [shape = 's32[1]{0}', space=sflag, size = 0x4, scoped, tag = 'scoped memory for mlp1_forward_padded.1']
    #allocation7 [shape = 'u8[32768]{0}', space=vmem, size = 0x8000, scoped, tag = 'input window, operand 3, single buffered']
    #allocation8 [shape = 'u8[4096]{0}', space=vmem, size = 0x1000, scoped, tag = 'output window, operand 0, single buffered']
    %10 = vsyncpa [#allocation3], 0
    %11 = vsyncpa [#allocation6], 0
    %12 = vsyncpa [#allocation4], 0
    // Predicated region
    $region2: #{mlp1_forward_padded.1} parent=1 // pred_check
      _
    $region3: #{mlp1_forward_padded.1} parent=1 // pred_check_branch
      %14 = sbr.rel (0) target = $region5
    $region4: #{mlp1_forward_padded.1} parent=1 // pred_region
      %16 = vsyncadd [#allocation3], 0
      %s18 = sshll.u32 %s0, 4
      %s19 = int_to_ptr.hbm [resolvable:$true] %s18
      %s20 = sshll.u32 [#allocation2], 4
      %s21 = int_to_ptr.vmem [resolvable:$true] %s20
      %23 = dma.hbm_to_vmem [thread:$0]  %s19, 128, %s21, [#allocation3]
    $region5: #{mlp1_forward_padded.1} parent=1 // pred_fallthru
      _
    // Predicated region
    $region6: #{mlp1_forward_padded.1} parent=1 // pred_check
      _
    $region7: #{mlp1_forward_padded.1} parent=1 // pred_check_branch
      %25 = sbr.rel (0) target = $region9
    $region8: #{mlp1_forward_padded.1} parent=1 // pred_region
      %27 = vsyncadd [#allocation6], 0
      %s28 = sshll.u32 %s1, 4
      %s29 = int_to_ptr.hbm [resolvable:$true] %s28
      %s30 = sshll.u32 [#allocation5], 4
      %s31 = int_to_ptr.vmem [resolvable:$true] %s30
      %36 = dma.hbm_to_vmem [thread:$0]  %s29, 256, %s31, [#allocation6], 64, 64, 4
    $region9: #{mlp1_forward_padded.1} parent=1 // pred_fallthru
      _
    // Predicated region
    $region10: #{mlp1_forward_padded.1} parent=1 // pred_check
      _
    $region11: #{mlp1_forward_padded.1} parent=1 // pred_check_branch
      %38 = sbr.rel (0) target = $region13
    $region12: #{mlp1_forward_padded.1} parent=1 // pred_region
      _
    $region13: #{mlp1_forward_padded.1} parent=1 // pred_fallthru
      _
    // Predicated region
    $region14: #{mlp1_forward_padded.1} parent=1 // pred_check
      _
    $region15: #{mlp1_forward_padded.1} parent=1 // pred_check_branch
      %40 = sbr.rel (0) target = $region17
    $region16: #{mlp1_forward_padded.1} parent=1 // pred_region
      %42 = vsyncadd [#allocation6], 0
      %s43 = sshll.u32 %s3, 4
      %s44 = int_to_ptr.hbm [resolvable:$true] %s43
      %s45 = sshll.u32 [#allocation7], 4
      %s46 = int_to_ptr.vmem [resolvable:$true] %s45
      %51 = dma.hbm_to_vmem [thread:$0]  %s44, 1024, %s46, [#allocation6], 64, 64, 4
    $region17: #{mlp1_forward_padded.1} parent=1 // pred_fallthru
      _
    // Predicated region
    $region18: #{mlp1_forward_padded.1} parent=1 // pred_check
      _
    $region19: #{mlp1_forward_padded.1} parent=1 // pred_check_branch
      %53 = sbr.rel (0) target = $region21
    $region20: #{mlp1_forward_padded.1} parent=1 // pred_region
      _
    $region21: #{mlp1_forward_padded.1} parent=1 // pred_fallthru
      _
    // Predicated region
    $region22: #{mlp1_forward_padded.1} parent=1 // pred_check
      _
    $region23: #{mlp1_forward_padded.1} parent=1 // pred_check_branch
      %55 = sbr.rel (0) target = $region25
    $region24: #{mlp1_forward_padded.1} parent=1 // pred_region
      %57 = dma.done [#allocation3], 128
    $region25: #{mlp1_forward_padded.1} parent=1 // pred_fallthru
      _
    // Predicated region
    $region26: #{mlp1_forward_padded.1} parent=1 // pred_check
      _
    $region27: #{mlp1_forward_padded.1} parent=1 // pred_check_branch
      %59 = sbr.rel (0) target = $region29
    $region28: #{mlp1_forward_padded.1} parent=1 // pred_region
      %61 = dma.done [#allocation6], 256
    $region29: #{mlp1_forward_padded.1} parent=1 // pred_fallthru
      _
    // Predicated region
    $region30: #{mlp1_forward_padded.1} parent=1 // pred_check
      _
    $region31: #{mlp1_forward_padded.1} parent=1 // pred_check_branch
      %63 = sbr.rel (0) target = $region33
    $region32: #{mlp1_forward_padded.1} parent=1 // pred_region
      %65 = dma.done [#allocation6], 1024
    $region33: #{mlp1_forward_padded.1} parent=1 // pred_fallthru
      _
    %v67 = vld [vmem:[#allocation2] sm:$0xff]
    %v68 = vpack.c.bf16 %v67, %v67
    %v69 = vld [vmem:[%s2] sm:$0x1]
    %v70 = vld [vmem:[#allocation5] sm:$0xf]
    %v71 = vld [vmem:[#allocation5 + $0x4] sm:$0xf]
    %v72 = vld [vmem:[#allocation5 + $0x8] sm:$0xf]
    %v73 = vld [vmem:[#allocation5 + $0xc] sm:$0xf]
    %v78 = vunpack.c.l.b16 %v70
    %v79 = vunpack.c.l.b16 %v71
    %v80 = vunpack.c.l.b16 %v72
    %v81 = vunpack.c.l.b16 %v73
    %v82 = vpack.c.b16 %v79, %v78
    %v83 = vpack.c.b16 %v81, %v80
    %vm86 = vcmask 261120
    %v88 = vsel %vm86, %v68, 0
    %90 = vmatpush.bf16.msra.mxu0 0
    %91 = vmatpush.bf16.msra.mxu0 0
    %92 = vmatpush.bf16.msra.mxu0 0
    %93 = vmatpush.bf16.msra.mxu0 0
    %94 = vmatpush.bf16.msra.mxu0 0
    %95 = vmatpush.bf16.msra.mxu0 0
    %96 = vmatpush.bf16.msra.mxu0 %v83
    %97 = vmatpush.bf16.msra.mxu0 %v82
    %98 = vmatmul.bf16.gmra.mxu0 %v88
    %v99 = vpop.f32.mrf.mxu0
    %v100 = vadd.f32 0.0, %v99
    %v101 = vpop.f32.mrf.mxu0
    %102 = vdwg.mxu0
    %v104 = vperm.slane %v69, 0
    %v106 = vadd.f32 %v104, %v100
    %v107 = vmax.f32 %v106, 0.0
    %v108 = vpack.c.bf16 %v107, %v107
    %v109 = vld [vmem:[%s4] sm:$0x1]
    %v110 = vld [vmem:[#allocation7] sm:$0xf]
    %v111 = vld [vmem:[#allocation7 + $0x4] sm:$0xf]
    %v112 = vld [vmem:[#allocation7 + $0x8] sm:$0xf]
    %v113 = vld [vmem:[#allocation7 + $0xc] sm:$0xf]
    %v114 = vld [vmem:[#allocation7 + $0x10] sm:$0xf]
    %v115 = vld [vmem:[#allocation7 + $0x14] sm:$0xf]
    %v116 = vld [vmem:[#allocation7 + $0x18] sm:$0xf]
    %v117 = vld [vmem:[#allocation7 + $0x1c] sm:$0xf]
    %v118 = vld [vmem:[#allocation7 + $0x20] sm:$0xf]
    %v119 = vld [vmem:[#allocation7 + $0x24] sm:$0xf]
    %v120 = vld [vmem:[#allocation7 + $0x28] sm:$0xf]
    %v121 = vld [vmem:[#allocation7 + $0x2c] sm:$0xf]
    %v122 = vld [vmem:[#allocation7 + $0x30] sm:$0xf]
    %v123 = vld [vmem:[#allocation7 + $0x34] sm:$0xf]
    %v124 = vld [vmem:[#allocation7 + $0x38] sm:$0xf]
    %v125 = vld [vmem:[#allocation7 + $0x3c] sm:$0xf]
    %v142 = vunpack.c.l.b16 %v110
    %v143 = vunpack.c.l.b16 %v111
    %v144 = vunpack.c.l.b16 %v112
    %v145 = vunpack.c.l.b16 %v113
    %v146 = vunpack.c.l.b16 %v114
    %v147 = vunpack.c.l.b16 %v115
    %v148 = vunpack.c.l.b16 %v116
    %v149 = vunpack.c.l.b16 %v117
    %v150 = vunpack.c.l.b16 %v118
    %v151 = vunpack.c.l.b16 %v119
    %v152 = vunpack.c.l.b16 %v120
    %v153 = vunpack.c.l.b16 %v121
    %v154 = vunpack.c.l.b16 %v122
    %v155 = vunpack.c.l.b16 %v123
    %v156 = vunpack.c.l.b16 %v124
    %v157 = vunpack.c.l.b16 %v125
    %v158 = vpack.c.b16 %v143, %v142
    %v159 = vpack.c.b16 %v145, %v144
    %v160 = vpack.c.b16 %v147, %v146
    %v161 = vpack.c.b16 %v149, %v148
    %v162 = vpack.c.b16 %v151, %v150
    %v163 = vpack.c.b16 %v153, %v152
    %v164 = vpack.c.b16 %v155, %v154
    %v165 = vpack.c.b16 %v157, %v156
    %174 = vmatpush.bf16.msra.mxu0 %v165
    %175 = vmatpush.bf16.msra.mxu0 %v164
    %176 = vmatpush.bf16.msra.mxu0 %v163
    %177 = vmatpush.bf16.msra.mxu0 %v162
    %178 = vmatpush.bf16.msra.mxu0 %v161
    %179 = vmatpush.bf16.msra.mxu0 %v160
    %180 = vmatpush.bf16.msra.mxu0 %v159
    %181 = vmatpush.bf16.msra.mxu0 %v158
    %182 = vmatmul.bf16.gmra.mxu0 %v108
    %v183 = vpop.f32.mrf.mxu0
    %v184 = vadd.f32 0.0, %v183
    %v185 = vpop.f32.mrf.mxu0
    %186 = vdwg.mxu0
    %v188 = vperm.slane %v109, 0
    %v190 = vadd.f32 %v188, %v184
    %191 = vst [vmem:[#allocation8] sm:$0xff] %v190
    // Predicated region
    $region34: #{mlp1_forward_padded.1} parent=1 // pred_check
      _
    $region35: #{mlp1_forward_padded.1} parent=1 // pred_check_branch
      %193 = sbr.rel (0) target = $region37
    $region36: #{mlp1_forward_padded.1} parent=1 // pred_region
      %195 = vsyncadd [#allocation4], 0
      %s197 = sshll.u32 [#allocation8], 4
      %s198 = int_to_ptr.vmem [resolvable:$true] %s197
      %s199 = sshll.u32 %s5, 4
      %s200 = int_to_ptr.hbm [resolvable:$true] %s199
      %202 = dma.vmem_to_hbm [thread:$0]  %s198, 128, %s200, [#allocation4]
    $region37: #{mlp1_forward_padded.1} parent=1 // pred_fallthru
      _
    // Predicated region
    $region38: #{mlp1_forward_padded.1} parent=1 // pred_check
      _
    $region39: #{mlp1_forward_padded.1} parent=1 // pred_check_branch
      %204 = sbr.rel (0) target = $region41
    $region40: #{mlp1_forward_padded.1} parent=1 // pred_region
      %206 = dma.done [#allocation4], 128
    $region41: #{mlp1_forward_padded.1} parent=1 // pred_fallthru
      _
    %207 = vsyncpa [#allocation3], 1
    %208 = vsyncpa [#allocation6], 1
    %209 = vsyncpa [#allocation4], 1

// kernel: mlp1_forward_padded.1
$region0: #{mlp1_forward_padded.1}
  #allocation0 [shape = 'u32[]', space=smem, size = 0x4, offset = 0x4, fixed_abs, tag = 'smem constant byte address 0x4 - core index']
  #allocation1 [shape = 'u32[72,128]{1,0:T(1,128)}', space=vmem, size = 0x9000, scoped, tag = 'internal scratch']
  %s0 = inlined_call_operand.hbm [shape: f32[8,32], index: 0, kind: input, shape index: {}]
  %s1 = inlined_call_operand.hbm [shape: bf16[32,128], index: 1, kind: input, shape index: {}]
  %s2 = inlined_call_operand.vmem [shape: f32[1,128], index: 2, kind: input, shape index: {}]
  %s3 = inlined_call_operand.hbm [shape: bf16[128,128], index: 3, kind: input, shape index: {}]
  %s4 = inlined_call_operand.vmem [shape: f32[1,128], index: 4, kind: input, shape index: {}]
  %s5 = inlined_call_operand.hbm [shape: f32[8,128], index: 5, kind: output, shape index: {}]
  %s6 = sld [smem:[#allocation0]]
  $region42: #{mlp1_forward_padded.1} parent=0
    _
  %s8 = ssub.s32 1, %s6
  %s9 = scalar_select 0, %s8, %s6
  $region1: #{mlp1_forward_padded.1} parent=0
    #allocation2 [shape = 'u8[4096]{0}', space=vmem, size = 0x1000, scoped, tag = 'input window, operand 0, single buffered']
    #allocation3 [shape = 's32[1]{0}', space=sflag, size = 0x4, scoped, tag = 'scoped memory for mlp1_forward_padded.1']
    #allocation4 [shape = 's32[1]{0}', space=sflag, size = 0x4, scoped, tag = 'scoped memory for mlp1_forward_padded.1']
    #allocation5 [shape = 'u8[8192]{0}', space=vmem, size = 0x2000, scoped, tag = 'input window, operand 1, single buffered']
    #allocation6 [shape = 's32[1]{0}', space=sflag, size = 0x4, scoped, tag = 'scoped memory for mlp1_forward_padded.1']
    #allocation7 [shape = 'u8[32768]{0}', space=vmem, size = 0x8000, scoped, tag = 'input window, operand 3, single buffered']
    #allocation8 [shape = 'u8[4096]{0}', space=vmem, size = 0x1000, scoped, tag = 'output window, operand 0, single buffered']
    %10 = vsyncpa [#allocation3], 0
    %11 = vsyncpa [#allocation6], 0
    %12 = vsyncpa [#allocation4], 0
    // Predicated region
    $region2: #{mlp1_forward_padded.1} parent=1 // pred_check
      _
    $region3: #{mlp1_forward_padded.1} parent=1 // pred_check_branch
      %14 = sbr.rel (0) target = $region5
    $region4: #{mlp1_forward_padded.1} parent=1 // pred_region
      %16 = vsyncadd [#allocation3], 0
      %s18 = sshll.u32 %s0, 4
      %s19 = int_to_ptr.hbm [resolvable:$true] %s18
      %s20 = sshll.u32 [#allocation2], 4
      %s21 = int_to_ptr.vmem [resolvable:$true] %s20
      %23 = dma.hbm_to_vmem [thread:$0]  %s19, 128, %s21, [#allocation3]
    $region5: #{mlp1_forward_padded.1} parent=1 // pred_fallthru
      _
    // Predicated region
    $region6: #{mlp1_forward_padded.1} parent=1 // pred_check
      _
    $region7: #{mlp1_forward_padded.1} parent=1 // pred_check_branch
      %25 = sbr.rel (0) target = $region9
    $region8: #{mlp1_forward_padded.1} parent=1 // pred_region
      %27 = vsyncadd [#allocation6], 0
      %s28 = sshll.u32 %s1, 4
      %s29 = int_to_ptr.hbm [resolvable:$true] %s28
      %s30 = sshll.u32 [#allocation5], 4
      %s31 = int_to_ptr.vmem [resolvable:$true] %s30
      %36 = dma.hbm_to_vmem [thread:$0]  %s29, 256, %s31, [#allocation6], 64, 64, 4
    $region9: #{mlp1_forward_padded.1} parent=1 // pred_fallthru
      _
    // Predicated region
    $region10: #{mlp1_forward_padded.1} parent=1 // pred_check
      _
    $region11: #{mlp1_forward_padded.1} parent=1 // pred_check_branch
      %38 = sbr.rel (0) target = $region13
    $region12: #{mlp1_forward_padded.1} parent=1 // pred_region
      _
    $region13: #{mlp1_forward_padded.1} parent=1 // pred_fallthru
      _
    // Predicated region
    $region14: #{mlp1_forward_padded.1} parent=1 // pred_check
      _
    $region15: #{mlp1_forward_padded.1} parent=1 // pred_check_branch
      %40 = sbr.rel (0) target = $region17
    $region16: #{mlp1_forward_padded.1} parent=1 // pred_region
      %42 = vsyncadd [#allocation6], 0
      %s43 = sshll.u32 %s3, 4
      %s44 = int_to_ptr.hbm [resolvable:$true] %s43
      %s45 = sshll.u32 [#allocation7], 4
      %s46 = int_to_ptr.vmem [resolvable:$true] %s45
      %51 = dma.hbm_to_vmem [thread:$0]  %s44, 1024, %s46, [#allocation6], 64, 64, 4
    $region17: #{mlp1_forward_padded.1} parent=1 // pred_fallthru
      _
    // Predicated region
    $region18: #{mlp1_forward_padded.1} parent=1 // pred_check
      _
    $region19: #{mlp1_forward_padded.1} parent=1 // pred_check_branch
      %53 = sbr.rel (0) target = $region21
    $region20: #{mlp1_forward_padded.1} parent=1 // pred_region
      _
    $region21: #{mlp1_forward_padded.1} parent=1 // pred_fallthru
      _
    // Predicated region
    $region22: #{mlp1_forward_padded.1} parent=1 // pred_check
      _
    $region23: #{mlp1_forward_padded.1} parent=1 // pred_check_branch
      %55 = sbr.rel (0) target = $region25
    $region24: #{mlp1_forward_padded.1} parent=1 // pred_region
      %57 = dma.done [#allocation3], 128
    $region25: #{mlp1_forward_padded.1} parent=1 // pred_fallthru
      _
    // Predicated region
    $region26: #{mlp1_forward_padded.1} parent=1 // pred_check
      _
    $region27: #{mlp1_forward_padded.1} parent=1 // pred_check_branch
      %59 = sbr.rel (0) target = $region29
    $region28: #{mlp1_forward_padded.1} parent=1 // pred_region
      %61 = dma.done [#allocation6], 256
    $region29: #{mlp1_forward_padded.1} parent=1 // pred_fallthru
      _
    // Predicated region
    $region30: #{mlp1_forward_padded.1} parent=1 // pred_check
      _
    $region31: #{mlp1_forward_padded.1} parent=1 // pred_check_branch
      %63 = sbr.rel (0) target = $region33
    $region32: #{mlp1_forward_padded.1} parent=1 // pred_region
      %65 = dma.done [#allocation6], 1024
    $region33: #{mlp1_forward_padded.1} parent=1 // pred_fallthru
      _
    %v67 = vld [vmem:[#allocation2] sm:$0xff]
    %v68 = vpack.c.bf16 %v67, %v67
    %v69 = vld [vmem:[%s2] sm:$0x1]
    %v70 = vld [vmem:[#allocation5] sm:$0xf]
    %v71 = vld [vmem:[#allocation5 + $0x4] sm:$0xf]
    %v72 = vld [vmem:[#allocation5 + $0x8] sm:$0xf]
    %v73 = vld [vmem:[#allocation5 + $0xc] sm:$0xf]
    %v78 = vunpack.c.l.b16 %v70
    %v79 = vunpack.c.l.b16 %v71
    %v80 = vunpack.c.l.b16 %v72
    %v81 = vunpack.c.l.b16 %v73
    %v82 = vpack.c.b16 %v79, %v78
    %v83 = vpack.c.b16 %v81, %v80
    %vm86 = vcmask 261120
    %v88 = vsel %vm86, %v68, 0
    %90 = vmatpush.bf16.msra.mxu0 0
    %91 = vmatpush.bf16.msra.mxu0 0
    %92 = vmatpush.bf16.msra.mxu0 0
    %93 = vmatpush.bf16.msra.mxu0 0
    %94 = vmatpush.bf16.msra.mxu0 0
    %95 = vmatpush.bf16.msra.mxu0 0
    %96 = vmatpush.bf16.msra.mxu0 %v83
    %97 = vmatpush.bf16.msra.mxu0 %v82
    %98 = vmatmul.bf16.gmra.mxu0 %v88
    %v99 = vpop.f32.mrf.mxu0
    %v100 = vadd.f32 0.0, %v99
    %v101 = vpop.f32.mrf.mxu0
    %102 = vdwg.mxu0
    %v104 = vperm.slane %v69, 0
    %v106 = vadd.f32 %v104, %v100
    %v107 = vmax.f32 %v106, 0.0
    %v108 = vpack.c.bf16 %v107, %v107
    %v109 = vld [vmem:[%s4] sm:$0x1]
    %v110 = vld [vmem:[#allocation7] sm:$0xf]
    %v111 = vld [vmem:[#allocation7 + $0x4] sm:$0xf]
    %v112 = vld [vmem:[#allocation7 + $0x8] sm:$0xf]
    %v113 = vld [vmem:[#allocation7 + $0xc] sm:$0xf]
    %v114 = vld [vmem:[#allocation7 + $0x10] sm:$0xf]
    %v115 = vld [vmem:[#allocation7 + $0x14] sm:$0xf]
    %v116 = vld [vmem:[#allocation7 + $0x18] sm:$0xf]
    %v117 = vld [vmem:[#allocation7 + $0x1c] sm:$0xf]
    %v118 = vld [vmem:[#allocation7 + $0x20] sm:$0xf]
    %v119 = vld [vmem:[#allocation7 + $0x24] sm:$0xf]
    %v120 = vld [vmem:[#allocation7 + $0x28] sm:$0xf]
    %v121 = vld [vmem:[#allocation7 + $0x2c] sm:$0xf]
    %v122 = vld [vmem:[#allocation7 + $0x30] sm:$0xf]
    %v123 = vld [vmem:[#allocation7 + $0x34] sm:$0xf]
    %v124 = vld [vmem:[#allocation7 + $0x38] sm:$0xf]
    %v125 = vld [vmem:[#allocation7 + $0x3c] sm:$0xf]
    %v142 = vunpack.c.l.b16 %v110
    %v143 = vunpack.c.l.b16 %v111
    %v144 = vunpack.c.l.b16 %v112
    %v145 = vunpack.c.l.b16 %v113
    %v146 = vunpack.c.l.b16 %v114
    %v147 = vunpack.c.l.b16 %v115
    %v148 = vunpack.c.l.b16 %v116
    %v149 = vunpack.c.l.b16 %v117
    %v150 = vunpack.c.l.b16 %v118
    %v151 = vunpack.c.l.b16 %v119
    %v152 = vunpack.c.l.b16 %v120
    %v153 = vunpack.c.l.b16 %v121
    %v154 = vunpack.c.l.b16 %v122
    %v155 = vunpack.c.l.b16 %v123
    %v156 = vunpack.c.l.b16 %v124
    %v157 = vunpack.c.l.b16 %v125
    %v158 = vpack.c.b16 %v143, %v142
    %v159 = vpack.c.b16 %v145, %v144
    %v160 = vpack.c.b16 %v147, %v146
    %v161 = vpack.c.b16 %v149, %v148
    %v162 = vpack.c.b16 %v151, %v150
    %v163 = vpack.c.b16 %v153, %v152
    %v164 = vpack.c.b16 %v155, %v154
    %v165 = vpack.c.b16 %v157, %v156
    %174 = vmatpush.bf16.msra.mxu0 %v165
    %175 = vmatpush.bf16.msra.mxu0 %v164
    %176 = vmatpush.bf16.msra.mxu0 %v163
    %177 = vmatpush.bf16.msra.mxu0 %v162
    %178 = vmatpush.bf16.msra.mxu0 %v161
    %179 = vmatpush.bf16.msra.mxu0 %v160
    %180 = vmatpush.bf16.msra.mxu0 %v159
    %181 = vmatpush.bf16.msra.mxu0 %v158
    %182 = vmatmul.bf16.gmra.mxu0 %v108
    %v183 = vpop.f32.mrf.mxu0
    %v184 = vadd.f32 0.0, %v183
    %v185 = vpop.f32.mrf.mxu0
    %186 = vdwg.mxu0
    %v188 = vperm.slane %v109, 0
    %v190 = vadd.f32 %v188, %v184
    %191 = vst [vmem:[#allocation8] sm:$0xff] %v190
    // Predicated region
    $region34: #{mlp1_forward_padded.1} parent=1 // pred_check
      _
    $region35: #{mlp1_forward_padded.1} parent=1 // pred_check_branch
      %193 = sbr.rel (0) target = $region37
    $region36: #{mlp1_forward_padded.1} parent=1 // pred_region
      %195 = vsyncadd [#allocation4], 0
      %s197 = sshll.u32 [#allocation8], 4
      %s198 = int_to_ptr.vmem [resolvable:$true] %s197
      %s199 = sshll.u32 %s5, 4
      %s200 = int_to_ptr.hbm [resolvable:$true] %s199
      %202 = dma.vmem_to_hbm [thread:$0]  %s198, 128, %s200, [#allocation4]
    $region37: #{mlp1_forward_padded.1} parent=1 // pred_fallthru
      _
    // Predicated region
    $region38: #{mlp1_forward_padded.1} parent=1 // pred_check
      _
    $region39: #{mlp1_forward_padded.1} parent=1 // pred_check_branch
      %204 = sbr.rel (0) target = $region41
    $region40: #{mlp1_forward_padded.1} parent=1 // pred_region
      %206 = dma.done [#allocation4], 128
    $region41: #{mlp1_forward_padded.1} parent=1 // pred_fallthru
      _
    %207 = vsyncpa [#allocation3], 1
    %208 = vsyncpa [#allocation6], 1
    %209 = vsyncpa [#allocation4], 1

</llo_original>
